<compile_context>
chip_gen: v5e
topology: v5e:2x2
jax: 0.10.0
libtpu: 0.0.40
codegen_flags: <defaults>
</compile_context>

<pallas_src>
import jax
import jax.numpy as jnp
from jax.experimental import pallas as pl
from jax.experimental.pallas import tpu as pltpu

EPS = 1e-5
_VMEM_LIMIT = 32 << 20   # explicit scoped-VMEM budget; plenty for ~1-2 MiB tiles


# ---------------------------------------------------------------------------
# helpers
# ---------------------------------------------------------------------------
def _round_up(x, m):
    return (x + m - 1) // m * m


# ---------------------------------------------------------------------------
# Pallas kernels
# ---------------------------------------------------------------------------
def _make_conv_bn_kernel(m_true: int, relu: bool, has_residual: bool):
    """Fused conv(matmul) + training-mode BN (+ residual) (+ ReLU).

    The whole M (= N*HO*WO) extent lives in one tile, so the in-kernel column
    sums are the full batch statistics.  Padded LHS rows are exact zeros, so
    dividing by the true M gives correct mean / E[x^2].  Math in f32, output
    stored bf16 (next layer consumes bf16 MXU operands anyway).
    """
    inv_m = 1.0 / float(m_true)

    def kernel(p_ref, w_ref, g_ref, b_ref, *rest):
        if has_residual:
            r_ref, o_ref = rest
        else:
            (o_ref,) = rest
        acc = jnp.dot(p_ref[...], w_ref[...],
                      preferred_element_type=jnp.float32)            # [Mp, TN]
        mean = jnp.sum(acc, axis=0, keepdims=True) * inv_m            # [1, TN]
        var = jnp.maximum(
            jnp.sum(acc * acc, axis=0, keepdims=True) * inv_m - mean * mean,
            0.0)                                                      # clamp >= 0
        scale = g_ref[...] * jax.lax.rsqrt(var + EPS)                 # [1, TN]
        shift = b_ref[...] - mean * scale
        y = acc * scale + shift
        if has_residual:
            y = y + r_ref[...].astype(jnp.float32)
        if relu:
            y = jnp.maximum(y, 0.0)
        o_ref[...] = y.astype(o_ref.dtype)

    return kernel


def _make_maxpool_kernel(HO: int, WO: int):
    """3x3 / stride-2 / pad-1 max pool from even/odd row & column views.

    All nine taps are contiguous (unstrided) slices of the four parity views,
    so the kernel is pure VPU maxima with no reshapes / VMEM copies.
    """
    def kernel(ee_ref, eo_ref, oe_ref, oo_ref, o_ref):
        m = ee_ref[0, pl.ds(0, HO), pl.ds(0, WO), :]                 # (2h  ,2w  )
        m = jnp.maximum(m, eo_ref[0, pl.ds(0, HO), pl.ds(0, WO), :])  # (2h  ,2w+1)
        m = jnp.maximum(m, ee_ref[0, pl.ds(0, HO), pl.ds(1, WO), :])  # (2h  ,2w+2)
        m = jnp.maximum(m, oe_ref[0, pl.ds(0, HO), pl.ds(0, WO), :])  # (2h+1,2w  )
        m = jnp.maximum(m, oo_ref[0, pl.ds(0, HO), pl.ds(0, WO), :])  # (2h+1,2w+1)
        m = jnp.maximum(m, oe_ref[0, pl.ds(0, HO), pl.ds(1, WO), :])  # (2h+1,2w+2)
        m = jnp.maximum(m, ee_ref[0, pl.ds(1, HO), pl.ds(0, WO), :])  # (2h+2,2w  )
        m = jnp.maximum(m, eo_ref[0, pl.ds(1, HO), pl.ds(0, WO), :])  # (2h+2,2w+1)
        m = jnp.maximum(m, ee_ref[0, pl.ds(1, HO), pl.ds(1, WO), :])  # (2h+2,2w+2)
        o_ref[0] = m

    return kernel


# ---------------------------------------------------------------------------
# wrappers
# ---------------------------------------------------------------------------
def _im2col(x_nhwc, kh, kw, stride, pad):
    # TODO(synk): fold this into the matmul kernel via halo block reads.
    N, H, W, C = x_nhwc.shape
    HO = (H + 2 * pad - kh) // stride + 1
    WO = (W + 2 * pad - kw) // stride + 1
    xp = jnp.pad(x_nhwc, ((0, 0), (pad, pad), (pad, pad), (0, 0)))
    cols = []
    for i in range(kh):
        for j in range(kw):
            cols.append(xp[:, i:i + (HO - 1) * stride + 1:stride,
                           j:j + (WO - 1) * stride + 1:stride, :])
    patches = jnp.stack(cols, axis=3)          # [N, HO, WO, kh*kw, C]
    return patches, HO, WO


def conv_bn(x_nhwc, conv, *, relu=True, residual=None):
    """Fused conv (im2col matmul) + training-mode BN (+ residual) (+ ReLU).

    Input / output are NHWC bf16 with channels padded to a multiple of 128;
    padded channels stay exactly zero (zero weight columns, gamma=beta=0).
    """
    N, H, W, Cin = x_nhwc.shape
    assert Cin == conv["cin_pad"], (Cin, conv["cin_pad"])
    kh, kw = conv["kh"], conv["kw"]
    stride, pad = conv["stride"], conv["pad"]
    K, Kp, Cp = conv["k"], conv["k_pad"], conv["cout_pad"]

    patches, HO, WO = _im2col(x_nhwc, kh, kw, stride, pad)
    M = N * HO * WO
    p2 = patches.reshape(M, K)                      # already bf16
    Mp = _round_up(M, 16)                           # bf16 sublane packing
    if (Mp, Kp) != (M, K):
        p2 = jnp.pad(p2, ((0, Mp - M), (0, Kp - K)))

    # Collapse K (single K tile) and M (single M tile -> in-kernel BN stats are
    # the full batch stats).  Split only the Cout axis, kept "parallel".
    TN = min(Cp, 256)
    # TODO(synk): on v7x prefer TN=128 when Cp >= 256 so the Cout split feeds
    # both TensorCores; TN=256 kept here (v6e/v7x MXU-native width).
    n_t = Cp // TN

    args = [p2, conv["wmat"], conv["gamma"], conv["beta"]]
    in_specs = [pl.BlockSpec((Mp, Kp), lambda j: (0, 0)),
                pl.BlockSpec((Kp, TN), lambda j: (0, j)),
                pl.BlockSpec((1, TN), lambda j: (0, j)),
                pl.BlockSpec((1, TN), lambda j: (0, j))]
    if residual is not None:
        r2 = residual.reshape(M, Cp).astype(jnp.bfloat16)
        if Mp != M:
            r2 = jnp.pad(r2, ((0, Mp - M), (0, 0)))
        args.append(r2)
        in_specs.append(pl.BlockSpec((Mp, TN), lambda j: (0, j)))

    out = pl.pallas_call(
        _make_conv_bn_kernel(M, relu, residual is not None),
        grid=(n_t,),
        in_specs=in_specs,
        out_specs=pl.BlockSpec((Mp, TN), lambda j: (0, j)),
        out_shape=jax.ShapeDtypeStruct((Mp, Cp), jnp.bfloat16),
        compiler_params=pltpu.CompilerParams(
            dimension_semantics=("parallel",),
            vmem_limit_bytes=_VMEM_LIMIT),
    )(*args)

    if Mp != M:
        out = out[:M]
    return out.reshape(N, HO, WO, Cp)


def maxpool_3x3_s2(x_nhwc):
    """3x3 / stride-2 / pad-1 max pool on the channel-padded bf16 layout."""
    N, H, W, C = x_nhwc.shape
    HO = (H + 2 - 3) // 2 + 1
    WO = (W + 2 - 3) // 2 + 1
    neg = float(jnp.finfo(x_nhwc.dtype).min)
    xp = jnp.pad(x_nhwc, ((0, 0), (1, 1), (1, 1), (0, 0)), constant_values=neg)
    # four parity views (even/odd rows x even/odd cols); total traffic ~1x the
    # padded map instead of the 9x patch stacking.
    ee = xp[:, 0::2, 0::2, :]
    eo = xp[:, 0::2, 1::2, :]
    oe = xp[:, 1::2, 0::2, :]
    oo = xp[:, 1::2, 1::2, :]

    def spec(v):
        return pl.BlockSpec((1,) + v.shape[1:], lambda n: (n, 0, 0, 0))

    return pl.pallas_call(
        _make_maxpool_kernel(HO, WO),
        grid=(N,),
        in_specs=[spec(ee), spec(eo), spec(oe), spec(oo)],
        out_specs=pl.BlockSpec((1, HO, WO, C), lambda n: (n, 0, 0, 0)),
        out_shape=jax.ShapeDtypeStruct((N, HO, WO, C), x_nhwc.dtype),
        compiler_params=pltpu.CompilerParams(
            dimension_semantics=("parallel",),
            vmem_limit_bytes=_VMEM_LIMIT),
    )(ee, eo, oe, oo)


# ---------------------------------------------------------------------------
# ResNet-18 backbone (layers 0..3)
# ---------------------------------------------------------------------------
def basic_block(x, blk):
    identity = x
    out = conv_bn(x, blk["conv1"], relu=True)
    if "downsample" in blk:
        identity = conv_bn(x, blk["downsample"], relu=False)
    return conv_bn(out, blk["conv2"], relu=True, residual=identity)


def thermal_module_forward(x_nchw, params, fusion_layer=4):
    # NCHW -> NHWC bf16; channels stay padded (multiple of 128) between layers
    # so every Pallas load/store is lane-dense; slice back only at the end.
    x = jnp.transpose(x_nchw, (0, 2, 3, 1)).astype(jnp.bfloat16)
    c_real = x.shape[-1]
    for i in range(fusion_layer):
        if i == 0:
            x = conv_bn(x, params["conv1"], relu=True)
            x = maxpool_3x3_s2(x)
            c_real = params["conv1"]["cout"]
        elif i < 5:
            for blk in params[f"layer{i}"]:
                x = basic_block(x, blk)
            c_real = params[f"layer{i}"][-1]["conv2"]["cout"]
        # TODO(synk): i == 5 branch (avgpool + Flatten + BatchNorm1d bottleneck)
        # is unreachable with the default fusion_layer=4, so it is not built.
    x = x[..., :c_real]                                   # drop channel padding
    return jnp.transpose(x, (0, 3, 1, 2)).astype(jnp.float32)   # back to NCHW


# ---------------------------------------------------------------------------
# Deterministic parameter init (weights pre-packed / pre-padded / pre-cast)
# ---------------------------------------------------------------------------
def _prep_conv(w_oihw, gamma, beta, stride, pad, cin_pad):
    cout, cin, kh, kw = w_oihw.shape
    Cp = _round_up(cout, 128)
    K = kh * kw * cin_pad
    Kp = _round_up(K, 128)
    w = jnp.transpose(w_oihw, (2, 3, 1, 0))               # [kh, kw, cin, cout]
    w = jnp.pad(w, ((0, 0), (0, 0), (0, cin_pad - cin), (0, Cp - cout)))
    wmat = w.reshape(K, Cp)
    if Kp != K:
        wmat = jnp.pad(wmat, ((0, Kp - K), (0, 0)))
    wmat = wmat.astype(jnp.bfloat16)
    g = jnp.pad(gamma, (0, Cp - cout)).reshape(1, Cp).astype(jnp.float32)
    b = jnp.pad(beta, (0, Cp - cout)).reshape(1, Cp).astype(jnp.float32)
    return dict(wmat=wmat, gamma=g, beta=b, kh=kh, kw=kw, stride=stride,
                pad=pad, cin=cin, cin_pad=cin_pad, cout=cout, k=K, k_pad=Kp,
                cout_pad=Cp)


def init_thermal_params(key):
    keys = iter(jax.random.split(key, 64))

    def nk():
        return next(keys)

    def conv_w(cout, cin, k):
        fan = cin * k * k
        return jax.random.normal(nk(), (cout, cin, k, k),
                                 jnp.float32) * (2.0 / fan) ** 0.5

    def bn(c):
        g = 1.0 + 0.1 * jax.random.normal(nk(), (c,), jnp.float32)
        b = 0.1 * jax.random.normal(nk(), (c,), jnp.float32)
        return g, b

    def conv(cin, cout, k, stride, pad, cin_pad=None):
        if cin_pad is None:
            cin_pad = _round_up(cin, 128)   # activations arrive channel-padded
        w = conv_w(cout, cin, k)
        g, b = bn(cout)
        return _prep_conv(w, g, b, stride, pad, cin_pad)

    def block(cin, cout, stride, downsample):
        p = {"conv1": conv(cin, cout, 3, stride, 1),
             "conv2": conv(cout, cout, 3, 1, 1)}
        if downsample:
            p["downsample"] = conv(cin, cout, 1, stride, 0)
        return p

    params = {"conv1": conv(3, 64, 7, 2, 3, cin_pad=3)}   # raw RGB input
    params["layer1"] = [block(64, 64, 1, False), block(64, 64, 1, False)]
    params["layer2"] = [block(64, 128, 2, True), block(128, 128, 1, False)]
    params["layer3"] = [block(128, 256, 2, True), block(256, 256, 1, False)]
    return params


if __name__ == "__main__":
    key = jax.random.PRNGKey(0)
    pkey, xkey = jax.random.split(key)
    params = init_thermal_params(pkey)

    # small NCHW input (batch=2, RGB, 32x32), matching resnet18's conv1 Cin=3
    x = jax.random.normal(xkey, (2, 3, 32, 32), jnp.float32)

    out = thermal_module_forward(x, params, fusion_layer=4)
    out = jax.block_until_ready(out)

    # layer3 of resnet18 on 32x32 input -> [N, 256, 2, 2]
    assert out.shape == (2, 256, 2, 2), out.shape
    assert bool(jnp.all(jnp.isfinite(out)))
    print("KERNEL_OK")
</pallas_src>

<mosaic_0001>
module attributes {stable_mosaic.version = 11 : i64} {
  func.func @kernel(%arg0: i32, %arg1: memref<512x256xbf16, #tpu.memory_space<vmem>>, %arg2: memref<256x128xbf16, #tpu.memory_space<vmem>>, %arg3: memref<1x128xf32, #tpu.memory_space<vmem>>, %arg4: memref<1x128xf32, #tpu.memory_space<vmem>>, %arg5: memref<512x128xbf16, #tpu.memory_space<vmem>>) attributes {dimension_semantics = [#tpu.dimension_semantics<parallel>], iteration_bounds = array<i64: 1>, scalar_prefetch = 0 : i64, scratch_operands = 0 : i64, tpu.core_type = #tpu.core_type<tc>, window_params = [{pipeline_mode = #tpu.pipeline_mode<synchronous>, transform_indices = @transform_0, window_bounds = array<i64: 512, 256>}, {transform_indices = @transform_1, window_bounds = array<i64: 256, 128>}, {transform_indices = @transform_2, window_bounds = array<i64: 1, 128>}, {transform_indices = @transform_3, window_bounds = array<i64: 1, 128>}, {transform_indices = @transform_4, window_bounds = array<i64: 512, 128>}]} {
    %c0 = arith.constant 0 : index
    %c0_0 = arith.constant 0 : index
    %0 = vector.load %arg1[%c0, %c0_0] : memref<512x256xbf16, #tpu.memory_space<vmem>>, vector<512x256xbf16>
    %c0_1 = arith.constant 0 : index
    %c0_2 = arith.constant 0 : index
    %1 = vector.load %arg2[%c0_1, %c0_2] : memref<256x128xbf16, #tpu.memory_space<vmem>>, vector<256x128xbf16>
    %cst = arith.constant dense<0.000000e+00> : vector<512x128xf32>
    %2 = tpu.matmul %0, %1, %cst {dimension_numbers = #tpu.dot_dimension_numbers<[1], [0], [0], [1], [0, 0, 1, 1], [], []>} : vector<512x256xbf16>, vector<256x128xbf16>, vector<512x128xf32> -> vector<512x128xf32>
    %cst_3 = arith.constant dense<0.000000e+00> : vector<128xf32>
    %3 = vector.multi_reduction <add>, %2, %cst_3 [0] : vector<512x128xf32> to vector<128xf32>
    %4 = vector.shape_cast %3 : vector<128xf32> to vector<1x128xf32>
    %cst_4 = arith.constant 0.001953125 : f32
    %5 = vector.broadcast %cst_4 : f32 to vector<1x128xf32>
    %6 = arith.mulf %4, %5 : vector<1x128xf32>
    %7 = arith.mulf %2, %2 : vector<512x128xf32>
    %cst_5 = arith.constant dense<0.000000e+00> : vector<128xf32>
    %8 = vector.multi_reduction <add>, %7, %cst_5 [0] : vector<512x128xf32> to vector<128xf32>
    %9 = vector.shape_cast %8 : vector<128xf32> to vector<1x128xf32>
    %cst_6 = arith.constant 0.001953125 : f32
    %10 = vector.broadcast %cst_6 : f32 to vector<1x128xf32>
    %11 = arith.mulf %9, %10 : vector<1x128xf32>
    %12 = arith.mulf %6, %6 : vector<1x128xf32>
    %13 = arith.subf %11, %12 : vector<1x128xf32>
    %cst_7 = arith.constant 0.000000e+00 : f32
    %14 = vector.broadcast %cst_7 : f32 to vector<1x128xf32>
    %15 = arith.maximumf %13, %14 : vector<1x128xf32>
    %c0_8 = arith.constant 0 : index
    %c0_9 = arith.constant 0 : index
    %16 = vector.load %arg3[%c0_8, %c0_9] : memref<1x128xf32, #tpu.memory_space<vmem>>, vector<1x128xf32>
    %cst_10 = arith.constant 9.99999974E-6 : f32
    %17 = vector.broadcast %cst_10 : f32 to vector<1x128xf32>
    %18 = arith.addf %15, %17 : vector<1x128xf32>
    %19 = math.rsqrt %18 : vector<1x128xf32>
    %20 = arith.mulf %16, %19 : vector<1x128xf32>
    %c0_11 = arith.constant 0 : index
    %c0_12 = arith.constant 0 : index
    %21 = vector.load %arg4[%c0_11, %c0_12] : memref<1x128xf32, #tpu.memory_space<vmem>>, vector<1x128xf32>
    %22 = arith.mulf %6, %20 : vector<1x128xf32>
    %23 = arith.subf %21, %22 : vector<1x128xf32>
    %24 = vector.broadcast %20 : vector<1x128xf32> to vector<512x128xf32>
    %25 = arith.mulf %2, %24 : vector<512x128xf32>
    %26 = vector.broadcast %23 : vector<1x128xf32> to vector<512x128xf32>
    %27 = arith.addf %25, %26 : vector<512x128xf32>
    %cst_13 = arith.constant 0.000000e+00 : f32
    %28 = vector.broadcast %cst_13 : f32 to vector<512x128xf32>
    %29 = arith.maximumf %27, %28 : vector<512x128xf32>
    %30 = arith.truncf %29 : vector<512x128xf32> to vector<512x128xbf16>
    %c0_14 = arith.constant 0 : index
    %c0_15 = arith.constant 0 : index
    %31 = vector.load %arg5[%c0_14, %c0_15] : memref<512x128xbf16, #tpu.memory_space<vmem>>, vector<512x128xbf16>
    tpu.vector_store %arg5[%c0_14, %c0_15], %30 {strides = array<i32>} : memref<512x128xbf16, #tpu.memory_space<vmem>>, vector<512x128xbf16>,
    return
  }
  func.func @transform_0(%arg0: i32) -> (i32, i32) {
    %c0_i32 = arith.constant 0 : i32
    %c0_i32_0 = arith.constant 0 : i32
    %c0_i32_1 = arith.constant 0 : i32
    return %c0_i32, %c0_i32_0 : i32, i32
  }
  func.func @transform_1(%arg0: i32) -> (i32, i32) {
    %c0_i32 = arith.constant 0 : i32
    %c0_i32_0 = arith.constant 0 : i32
    return %c0_i32, %arg0 : i32, i32
  }
  func.func @transform_2(%arg0: i32) -> (i32, i32) {
    %c0_i32 = arith.constant 0 : i32
    %c0_i32_0 = arith.constant 0 : i32
    return %c0_i32, %arg0 : i32, i32
  }
  func.func @transform_3(%arg0: i32) -> (i32, i32) {
    %c0_i32 = arith.constant 0 : i32
    %c0_i32_0 = arith.constant 0 : i32
    return %c0_i32, %arg0 : i32, i32
  }
  func.func @transform_4(%arg0: i32) -> (i32, i32) {
    %c0_i32 = arith.constant 0 : i32
    %c0_i32_0 = arith.constant 0 : i32
    return %c0_i32, %arg0 : i32, i32
  }
}

</mosaic_0001>

<llo_original>
// kernel: tpu_custom_call.1
$region0: #{tpu_custom_call.1}
  #allocation0 [shape = 'u32[]', space=smem, size = 0x4, offset = 0x4, fixed_abs, tag = 'smem constant byte address 0x4 - core index']
  #allocation1 [shape = 'u32[72,128]{1,0:T(1,128)}', space=vmem, size = 0x9000, scoped, tag = 'internal scratch']
  %s0 = inlined_call_operand.hbm [shape: bf16[512,256], index: 0, kind: input, shape index: {}]
  %s1 = inlined_call_operand.hbm [shape: bf16[256,128], index: 1, kind: input, shape index: {}]
  %s2 = inlined_call_operand.vmem [shape: f32[1,128], index: 2, kind: input, shape index: {}]
  %s3 = inlined_call_operand.vmem [shape: f32[1,128], index: 3, kind: input, shape index: {}]
  %s4 = inlined_call_operand.hbm [shape: bf16[512,128], index: 4, kind: output, shape index: {}]
  %s5 = sld [smem:[#allocation0]]
  $region34: #{tpu_custom_call.1} parent=0
    _
  %s7 = ssub.s32 1, %s5
  %s8 = scalar_select 0, %s7, %s5
  $region1: #{tpu_custom_call.1} parent=0
    #allocation2 [shape = 'u8[262144]{0}', space=vmem, size = 0x40000, scoped, tag = 'input window, operand 0, single buffered']
    #allocation3 [shape = 's32[1]{0}', space=sflag, size = 0x4, scoped, tag = 'scoped memory for tpu_custom_call.1']
    #allocation4 [shape = 's32[1]{0}', space=sflag, size = 0x4, scoped, tag = 'scoped memory for tpu_custom_call.1']
    #allocation5 [shape = 'u8[65536]{0}', space=vmem, size = 0x10000, scoped, tag = 'input window, operand 1, single buffered']
    #allocation6 [shape = 's32[1]{0}', space=sflag, size = 0x4, scoped, tag = 'scoped memory for tpu_custom_call.1']
    #allocation7 [shape = 'u8[131072]{0}', space=vmem, size = 0x20000, scoped, tag = 'output window, operand 0, single buffered']
    %9 = vsyncpa [#allocation3], 0
    %10 = vsyncpa [#allocation6], 0
    %11 = vsyncpa [#allocation4], 0
    // Predicated region
    $region2: #{tpu_custom_call.1} parent=1 // pred_check
      _
    $region3: #{tpu_custom_call.1} parent=1 // pred_check_branch
      %13 = sbr.rel (0) target = $region5
    $region4: #{tpu_custom_call.1} parent=1 // pred_region
      %15 = vsyncadd [#allocation3], 0
      %s16 = sshll.u32 %s0, 4
      %s17 = int_to_ptr.hbm [resolvable:$true] %s16
      %s18 = sshll.u32 [#allocation2], 4
      %s19 = int_to_ptr.vmem [resolvable:$true] %s18
      %24 = dma.hbm_to_vmem [thread:$0]  %s17, 8192, %s19, [#allocation3], 128, 128, 8
    $region5: #{tpu_custom_call.1} parent=1 // pred_fallthru
      _
    // Predicated region
    $region6: #{tpu_custom_call.1} parent=1 // pred_check
      _
    $region7: #{tpu_custom_call.1} parent=1 // pred_check_branch
      %26 = sbr.rel (0) target = $region9
    $region8: #{tpu_custom_call.1} parent=1 // pred_region
      %28 = vsyncadd [#allocation6], 0
      %s29 = sshll.u32 %s1, 4
      %s30 = int_to_ptr.hbm [resolvable:$true] %s29
      %s31 = sshll.u32 [#allocation5], 4
      %s32 = int_to_ptr.vmem [resolvable:$true] %s31
      %37 = dma.hbm_to_vmem [thread:$0]  %s30, 2048, %s32, [#allocation6], 64, 64, 4
    $region9: #{tpu_custom_call.1} parent=1 // pred_fallthru
      _
    // Predicated region
    $region10: #{tpu_custom_call.1} parent=1 // pred_check
      _
    $region11: #{tpu_custom_call.1} parent=1 // pred_check_branch
      %39 = sbr.rel (0) target = $region13
    $region12: #{tpu_custom_call.1} parent=1 // pred_region
      _
    $region13: #{tpu_custom_call.1} parent=1 // pred_fallthru
      _
    // Predicated region
    $region14: #{tpu_custom_call.1} parent=1 // pred_check
      _
    $region15: #{tpu_custom_call.1} parent=1 // pred_check_branch
      %41 = sbr.rel (0) target = $region17
    $region16: #{tpu_custom_call.1} parent=1 // pred_region
      _
    $region17: #{tpu_custom_call.1} parent=1 // pred_fallthru
      _
    // Predicated region
    $region18: #{tpu_custom_call.1} parent=1 // pred_check
      _
    $region19: #{tpu_custom_call.1} parent=1 // pred_check_branch
      %43 = sbr.rel (0) target = $region21
    $region20: #{tpu_custom_call.1} parent=1 // pred_region
      %45 = dma.done [#allocation3], 8192
    $region21: #{tpu_custom_call.1} parent=1 // pred_fallthru
      _
    // Predicated region
    $region22: #{tpu_custom_call.1} parent=1 // pred_check
      _
    $region23: #{tpu_custom_call.1} parent=1 // pred_check_branch
      %47 = sbr.rel (0) target = $region25
    $region24: #{tpu_custom_call.1} parent=1 // pred_region
      %49 = dma.done [#allocation6], 2048
    $region25: #{tpu_custom_call.1} parent=1 // pred_fallthru
      _
    %v50 = vld [vmem:[#allocation2] sm:$0xff]
    %v51 = vld [vmem:[#allocation2 + $0x8] sm:$0xff]
    %v52 = vld [vmem:[#allocation2 + $0x10] sm:$0xff]
    %v53 = vld [vmem:[#allocation2 + $0x18] sm:$0xff]
    %v54 = vld [vmem:[#allocation2 + $0x20] sm:$0xff]
    %v55 = vld [vmem:[#allocation2 + $0x28] sm:$0xff]
    %v56 = vld [vmem:[#allocation2 + $0x30] sm:$0xff]
    %v57 = vld [vmem:[#allocation2 + $0x38] sm:$0xff]
    %v58 = vld [vmem:[#allocation2 + $0x40] sm:$0xff]
    %v59 = vld [vmem:[#allocation2 + $0x48] sm:$0xff]
    %v60 = vld [vmem:[#allocation2 + $0x50] sm:$0xff]
    %v61 = vld [vmem:[#allocation2 + $0x58] sm:$0xff]
    %v62 = vld [vmem:[#allocation2 + $0x60] sm:$0xff]
    %v63 = vld [vmem:[#allocation2 + $0x68] sm:$0xff]
    %v64 = vld [vmem:[#allocation2 + $0x70] sm:$0xff]
    %v65 = vld [vmem:[#allocation2 + $0x78] sm:$0xff]
    %v66 = vld [vmem:[#allocation2 + $0x80] sm:$0xff]
    %v67 = vld [vmem:[#allocation2 + $0x88] sm:$0xff]
    %v68 = vld [vmem:[#allocation2 + $0x90] sm:$0xff]
    %v69 = vld [vmem:[#allocation2 + $0x98] sm:$0xff]
    %v70 = vld [vmem:[#allocation2 + $0xa0] sm:$0xff]
    %v71 = vld [vmem:[#allocation2 + $0xa8] sm:$0xff]
    %v72 = vld [vmem:[#allocation2 + $0xb0] sm:$0xff]
    %v73 = vld [vmem:[#allocation2 + $0xb8] sm:$0xff]
    %v74 = vld [vmem:[#allocation2 + $0xc0] sm:$0xff]
    %v75 = vld [vmem:[#allocation2 + $0xc8] sm:$0xff]
    %v76 = vld [vmem:[#allocation2 + $0xd0] sm:$0xff]
    %v77 = vld [vmem:[#allocation2 + $0xd8] sm:$0xff]
    %v78 = vld [vmem:[#allocation2 + $0xe0] sm:$0xff]
    %v79 = vld [vmem:[#allocation2 + $0xe8] sm:$0xff]
    %v80 = vld [vmem:[#allocation2 + $0xf0] sm:$0xff]
    %v81 = vld [vmem:[#allocation2 + $0xf8] sm:$0xff]
    %v82 = vld [vmem:[#allocation2 + $0x100] sm:$0xff]
    %v83 = vld [vmem:[#allocation2 + $0x108] sm:$0xff]
    %v84 = vld [vmem:[#allocation2 + $0x110] sm:$0xff]
    %v85 = vld [vmem:[#allocation2 + $0x118] sm:$0xff]
    %v86 = vld [vmem:[#allocation2 + $0x120] sm:$0xff]
    %v87 = vld [vmem:[#allocation2 + $0x128] sm:$0xff]
    %v88 = vld [vmem:[#allocation2 + $0x130] sm:$0xff]
    %v89 = vld [vmem:[#allocation2 + $0x138] sm:$0xff]
    %v90 = vld [vmem:[#allocation2 + $0x140] sm:$0xff]
    %v91 = vld [vmem:[#allocation2 + $0x148] sm:$0xff]
    %v92 = vld [vmem:[#allocation2 + $0x150] sm:$0xff]
    %v93 = vld [vmem:[#allocation2 + $0x158] sm:$0xff]
    %v94 = vld [vmem:[#allocation2 + $0x160] sm:$0xff]
    %v95 = vld [vmem:[#allocation2 + $0x168] sm:$0xff]
    %v96 = vld [vmem:[#allocation2 + $0x170] sm:$0xff]
    %v97 = vld [vmem:[#allocation2 + $0x178] sm:$0xff]
    %v98 = vld [vmem:[#allocation2 + $0x180] sm:$0xff]
    %v99 = vld [vmem:[#allocation2 + $0x188] sm:$0xff]
    %v100 = vld [vmem:[#allocation2 + $0x190] sm:$0xff]
    %v101 = vld [vmem:[#allocation2 + $0x198] sm:$0xff]
    %v102 = vld [vmem:[#allocation2 + $0x1a0] sm:$0xff]
    %v103 = vld [vmem:[#allocation2 + $0x1a8] sm:$0xff]
    %v104 = vld [vmem:[#allocation2 + $0x1b0] sm:$0xff]
    %v105 = vld [vmem:[#allocation2 + $0x1b8] sm:$0xff]
    %v106 = vld [vmem:[#allocation2 + $0x1c0] sm:$0xff]
    %v107 = vld [vmem:[#allocation2 + $0x1c8] sm:$0xff]
    %v108 = vld [vmem:[#allocation2 + $0x1d0] sm:$0xff]
    %v109 = vld [vmem:[#allocation2 + $0x1d8] sm:$0xff]
    %v110 = vld [vmem:[#allocation2 + $0x1e0] sm:$0xff]
    %v111 = vld [vmem:[#allocation2 + $0x1e8] sm:$0xff]
    %v112 = vld [vmem:[#allocation2 + $0x1f0] sm:$0xff]
    %v113 = vld [vmem:[#allocation2 + $0x1f8] sm:$0xff]
    %v114 = vld [vmem:[#allocation5] sm:$0xf]
    %v115 = vld [vmem:[#allocation5 + $0x4] sm:$0xf]
    %v116 = vld [vmem:[#allocation5 + $0x8] sm:$0xf]
    %v117 = vld [vmem:[#allocation5 + $0xc] sm:$0xf]
    %v118 = vld [vmem:[#allocation5 + $0x10] sm:$0xf]
    %v119 = vld [vmem:[#allocation5 + $0x14] sm:$0xf]
    %v120 = vld [vmem:[#allocation5 + $0x18] sm:$0xf]
    %v121 = vld [vmem:[#allocation5 + $0x1c] sm:$0xf]
    %v122 = vld [vmem:[#allocation5 + $0x20] sm:$0xf]
    %v123 = vld [vmem:[#allocation5 + $0x24] sm:$0xf]
    %v124 = vld [vmem:[#allocation5 + $0x28] sm:$0xf]
    %v125 = vld [vmem:[#allocation5 + $0x2c] sm:$0xf]
    %v126 = vld [vmem:[#allocation5 + $0x30] sm:$0xf]
    %v127 = vld [vmem:[#allocation5 + $0x34] sm:$0xf]
    %v128 = vld [vmem:[#allocation5 + $0x38] sm:$0xf]
    %v129 = vld [vmem:[#allocation5 + $0x3c] sm:$0xf]
    %v130 = vld [vmem:[#allocation5 + $0x40] sm:$0xf]
    %v131 = vld [vmem:[#allocation5 + $0x44] sm:$0xf]
    %v132 = vld [vmem:[#allocation5 + $0x48] sm:$0xf]
    %v133 = vld [vmem:[#allocation5 + $0x4c] sm:$0xf]
    %v134 = vld [vmem:[#allocation5 + $0x50] sm:$0xf]
    %v135 = vld [vmem:[#allocation5 + $0x54] sm:$0xf]
    %v136 = vld [vmem:[#allocation5 + $0x58] sm:$0xf]
    %v137 = vld [vmem:[#allocation5 + $0x5c] sm:$0xf]
    %v138 = vld [vmem:[#allocation5 + $0x60] sm:$0xf]
    %v139 = vld [vmem:[#allocation5 + $0x64] sm:$0xf]
    %v140 = vld [vmem:[#allocation5 + $0x68] sm:$0xf]
    %v141 = vld [vmem:[#allocation5 + $0x6c] sm:$0xf]
    %v142 = vld [vmem:[#allocation5 + $0x70] sm:$0xf]
    %v143 = vld [vmem:[#allocation5 + $0x74] sm:$0xf]
    %v144 = vld [vmem:[#allocation5 + $0x78] sm:$0xf]
    %v145 = vld [vmem:[#allocation5 + $0x7c] sm:$0xf]
    %v210 = vunpack.c.l.b16 %v50
    %v211 = vunpack.c.h.b16 %v50
    %v212 = vunpack.c.l.b16 %v51
    %v213 = vunpack.c.h.b16 %v51
    %v214 = vunpack.c.l.b16 %v52
    %v215 = vunpack.c.h.b16 %v52
    %v216 = vunpack.c.l.b16 %v53
    %v217 = vunpack.c.h.b16 %v53
    %v218 = vunpack.c.l.b16 %v54
    %v219 = vunpack.c.h.b16 %v54
    %v220 = vunpack.c.l.b16 %v55
    %v221 = vunpack.c.h.b16 %v55
    %v222 = vunpack.c.l.b16 %v56
    %v223 = vunpack.c.h.b16 %v56
    %v224 = vunpack.c.l.b16 %v57
    %v225 = vunpack.c.h.b16 %v57
    %v226 = vunpack.c.l.b16 %v58
    %v227 = vunpack.c.h.b16 %v58
    %v228 = vunpack.c.l.b16 %v59
    %v229 = vunpack.c.h.b16 %v59
    %v230 = vunpack.c.l.b16 %v60
    %v231 = vunpack.c.h.b16 %v60
    %v232 = vunpack.c.l.b16 %v61
    %v233 = vunpack.c.h.b16 %v61
    %v234 = vunpack.c.l.b16 %v62
    %v235 = vunpack.c.h.b16 %v62
    %v236 = vunpack.c.l.b16 %v63
    %v237 = vunpack.c.h.b16 %v63
    %v238 = vunpack.c.l.b16 %v64
    %v239 = vunpack.c.h.b16 %v64
    %v240 = vunpack.c.l.b16 %v65
    %v241 = vunpack.c.h.b16 %v65
    %v242 = vunpack.c.l.b16 %v66
    %v243 = vunpack.c.h.b16 %v66
    %v244 = vunpack.c.l.b16 %v67
    %v245 = vunpack.c.h.b16 %v67
    %v246 = vunpack.c.l.b16 %v68
    %v247 = vunpack.c.h.b16 %v68
    %v248 = vunpack.c.l.b16 %v69
    %v249 = vunpack.c.h.b16 %v69
    %v250 = vunpack.c.l.b16 %v70
    %v251 = vunpack.c.h.b16 %v70
    %v252 = vunpack.c.l.b16 %v71
    %v253 = vunpack.c.h.b16 %v71
    %v254 = vunpack.c.l.b16 %v72
    %v255 = vunpack.c.h.b16 %v72
    %v256 = vunpack.c.l.b16 %v73
    %v257 = vunpack.c.h.b16 %v73
    %v258 = vunpack.c.l.b16 %v74
    %v259 = vunpack.c.h.b16 %v74
    %v260 = vunpack.c.l.b16 %v75
    %v261 = vunpack.c.h.b16 %v75
    %v262 = vunpack.c.l.b16 %v76
    %v263 = vunpack.c.h.b16 %v76
    %v264 = vunpack.c.l.b16 %v77
    %v265 = vunpack.c.h.b16 %v77
    %v266 = vunpack.c.l.b16 %v78
    %v267 = vunpack.c.h.b16 %v78
    %v268 = vunpack.c.l.b16 %v79
    %v269 = vunpack.c.h.b16 %v79
    %v270 = vunpack.c.l.b16 %v80
    %v271 = vunpack.c.h.b16 %v80
    %v272 = vunpack.c.l.b16 %v81
    %v273 = vunpack.c.h.b16 %v81
    %v274 = vunpack.c.l.b16 %v82
    %v275 = vunpack.c.h.b16 %v82
    %v276 = vunpack.c.l.b16 %v83
    %v277 = vunpack.c.h.b16 %v83
    %v278 = vunpack.c.l.b16 %v84
    %v279 = vunpack.c.h.b16 %v84
    %v280 = vunpack.c.l.b16 %v85
    %v281 = vunpack.c.h.b16 %v85
    %v282 = vunpack.c.l.b16 %v86
    %v283 = vunpack.c.h.b16 %v86
    %v284 = vunpack.c.l.b16 %v87
    %v285 = vunpack.c.h.b16 %v87
    %v286 = vunpack.c.l.b16 %v88
    %v287 = vunpack.c.h.b16 %v88
    %v288 = vunpack.c.l.b16 %v89
    %v289 = vunpack.c.h.b16 %v89
    %v290 = vunpack.c.l.b16 %v90
    %v291 = vunpack.c.h.b16 %v90
    %v292 = vunpack.c.l.b16 %v91
    %v293 = vunpack.c.h.b16 %v91
    %v294 = vunpack.c.l.b16 %v92
    %v295 = vunpack.c.h.b16 %v92
    %v296 = vunpack.c.l.b16 %v93
    %v297 = vunpack.c.h.b16 %v93
    %v298 = vunpack.c.l.b16 %v94
    %v299 = vunpack.c.h.b16 %v94
    %v300 = vunpack.c.l.b16 %v95
    %v301 = vunpack.c.h.b16 %v95
    %v302 = vunpack.c.l.b16 %v96
    %v303 = vunpack.c.h.b16 %v96
    %v304 = vunpack.c.l.b16 %v97
    %v305 = vunpack.c.h.b16 %v97
    %v306 = vunpack.c.l.b16 %v98
    %v307 = vunpack.c.h.b16 %v98
    %v308 = vunpack.c.l.b16 %v99
    %v309 = vunpack.c.h.b16 %v99
    %v310 = vunpack.c.l.b16 %v100
    %v311 = vunpack.c.h.b16 %v100
    %v312 = vunpack.c.l.b16 %v101
    %v313 = vunpack.c.h.b16 %v101
    %v314 = vunpack.c.l.b16 %v102
    %v315 = vunpack.c.h.b16 %v102
    %v316 = vunpack.c.l.b16 %v103
    %v317 = vunpack.c.h.b16 %v103
    %v318 = vunpack.c.l.b16 %v104
    %v319 = vunpack.c.h.b16 %v104
    %v320 = vunpack.c.l.b16 %v105
    %v321 = vunpack.c.h.b16 %v105
    %v322 = vunpack.c.l.b16 %v106
    %v323 = vunpack.c.h.b16 %v106
    %v324 = vunpack.c.l.b16 %v107
    %v325 = vunpack.c.h.b16 %v107
    %v326 = vunpack.c.l.b16 %v108
    %v327 = vunpack.c.h.b16 %v108
    %v328 = vunpack.c.l.b16 %v109
    %v329 = vunpack.c.h.b16 %v109
    %v330 = vunpack.c.l.b16 %v110
    %v331 = vunpack.c.h.b16 %v110
    %v332 = vunpack.c.l.b16 %v111
    %v333 = vunpack.c.h.b16 %v111
    %v334 = vunpack.c.l.b16 %v112
    %v335 = vunpack.c.h.b16 %v112
    %v336 = vunpack.c.l.b16 %v113
    %v337 = vunpack.c.h.b16 %v113
    %v338 = vpack.c.b16 %v212, %v210
    %v339 = vpack.c.b16 %v213, %v211
    %v340 = vpack.c.b16 %v216, %v214
    %v341 = vpack.c.b16 %v217, %v215
    %v342 = vpack.c.b16 %v220, %v218
    %v343 = vpack.c.b16 %v221, %v219
    %v344 = vpack.c.b16 %v224, %v222
    %v345 = vpack.c.b16 %v225, %v223
    %v346 = vpack.c.b16 %v228, %v226
    %v347 = vpack.c.b16 %v229, %v227
    %v348 = vpack.c.b16 %v232, %v230
    %v349 = vpack.c.b16 %v233, %v231
    %v350 = vpack.c.b16 %v236, %v234
    %v351 = vpack.c.b16 %v237, %v235
    %v352 = vpack.c.b16 %v240, %v238
    %v353 = vpack.c.b16 %v241, %v239
    %v354 = vpack.c.b16 %v244, %v242
    %v355 = vpack.c.b16 %v245, %v243
    %v356 = vpack.c.b16 %v248, %v246
    %v357 = vpack.c.b16 %v249, %v247
    %v358 = vpack.c.b16 %v252, %v250
    %v359 = vpack.c.b16 %v253, %v251
    %v360 = vpack.c.b16 %v256, %v254
    %v361 = vpack.c.b16 %v257, %v255
    %v362 = vpack.c.b16 %v260, %v258
    %v363 = vpack.c.b16 %v261, %v259
    %v364 = vpack.c.b16 %v264, %v262
    %v365 = vpack.c.b16 %v265, %v263
    %v366 = vpack.c.b16 %v268, %v266
    %v367 = vpack.c.b16 %v269, %v267
    %v368 = vpack.c.b16 %v272, %v270
    %v369 = vpack.c.b16 %v273, %v271
    %v370 = vpack.c.b16 %v276, %v274
    %v371 = vpack.c.b16 %v277, %v275
    %v372 = vpack.c.b16 %v280, %v278
    %v373 = vpack.c.b16 %v281, %v279
    %v374 = vpack.c.b16 %v284, %v282
    %v375 = vpack.c.b16 %v285, %v283
    %v376 = vpack.c.b16 %v288, %v286
    %v377 = vpack.c.b16 %v289, %v287
    %v378 = vpack.c.b16 %v292, %v290
    %v379 = vpack.c.b16 %v293, %v291
    %v380 = vpack.c.b16 %v296, %v294
    %v381 = vpack.c.b16 %v297, %v295
    %v382 = vpack.c.b16 %v300, %v298
    %v383 = vpack.c.b16 %v301, %v299
    %v384 = vpack.c.b16 %v304, %v302
    %v385 = vpack.c.b16 %v305, %v303
    %v386 = vpack.c.b16 %v308, %v306
    %v387 = vpack.c.b16 %v309, %v307
    %v388 = vpack.c.b16 %v312, %v310
    %v389 = vpack.c.b16 %v313, %v311
    %v390 = vpack.c.b16 %v316, %v314
    %v391 = vpack.c.b16 %v317, %v315
    %v392 = vpack.c.b16 %v320, %v318
    %v393 = vpack.c.b16 %v321, %v319
    %v394 = vpack.c.b16 %v324, %v322
    %v395 = vpack.c.b16 %v325, %v323
    %v396 = vpack.c.b16 %v328, %v326
    %v397 = vpack.c.b16 %v329, %v327
    %v398 = vpack.c.b16 %v332, %v330
    %v399 = vpack.c.b16 %v333, %v331
    %v400 = vpack.c.b16 %v336, %v334
    %v401 = vpack.c.b16 %v337, %v335
    %v498 = vunpack.c.l.b16 %v114
    %v499 = vunpack.c.l.b16 %v115
    %v500 = vunpack.c.l.b16 %v116
    %v501 = vunpack.c.l.b16 %v117
    %v502 = vunpack.c.l.b16 %v118
    %v503 = vunpack.c.l.b16 %v119
    %v504 = vunpack.c.l.b16 %v120
    %v505 = vunpack.c.l.b16 %v121
    %v506 = vunpack.c.l.b16 %v122
    %v507 = vunpack.c.l.b16 %v123
    %v508 = vunpack.c.l.b16 %v124
    %v509 = vunpack.c.l.b16 %v125
    %v510 = vunpack.c.l.b16 %v126
    %v511 = vunpack.c.l.b16 %v127
    %v512 = vunpack.c.l.b16 %v128
    %v513 = vunpack.c.l.b16 %v129
    %v514 = vunpack.c.l.b16 %v130
    %v515 = vunpack.c.l.b16 %v131
    %v516 = vunpack.c.l.b16 %v132
    %v517 = vunpack.c.l.b16 %v133
    %v518 = vunpack.c.l.b16 %v134
    %v519 = vunpack.c.l.b16 %v135
    %v520 = vunpack.c.l.b16 %v136
    %v521 = vunpack.c.l.b16 %v137
    %v522 = vunpack.c.l.b16 %v138
    %v523 = vunpack.c.l.b16 %v139
    %v524 = vunpack.c.l.b16 %v140
    %v525 = vunpack.c.l.b16 %v141
    %v526 = vunpack.c.l.b16 %v142
    %v527 = vunpack.c.l.b16 %v143
    %v528 = vunpack.c.l.b16 %v144
    %v529 = vunpack.c.l.b16 %v145
    %v530 = vpack.c.b16 %v499, %v498
    %v531 = vpack.c.b16 %v501, %v500
    %v532 = vpack.c.b16 %v503, %v502
    %v533 = vpack.c.b16 %v505, %v504
    %v534 = vpack.c.b16 %v507, %v506
    %v535 = vpack.c.b16 %v509, %v508
    %v536 = vpack.c.b16 %v511, %v510
    %v537 = vpack.c.b16 %v513, %v512
    %v538 = vpack.c.b16 %v515, %v514
    %v539 = vpack.c.b16 %v517, %v516
    %v540 = vpack.c.b16 %v519, %v518
    %v541 = vpack.c.b16 %v521, %v520
    %v542 = vpack.c.b16 %v523, %v522
    %v543 = vpack.c.b16 %v525, %v524
    %v544 = vpack.c.b16 %v527, %v526
    %v545 = vpack.c.b16 %v529, %v528
    %562 = vmatpush.bf16.msra.mxu0 %v537
    %563 = vmatpush.bf16.msra.mxu0 %v536
    %564 = vmatpush.bf16.msra.mxu0 %v535
    %565 = vmatpush.bf16.msra.mxu0 %v534
    %566 = vmatpush.bf16.msra.mxu0 %v533
    %567 = vmatpush.bf16.msra.mxu0 %v532
    %568 = vmatpush.bf16.msra.mxu0 %v531
    %569 = vmatpush.bf16.msra.mxu0 %v530
    %570 = vmatmul.bf16.gmra.mxu0 %v338
    %v571 = vpop.f32.mrf.mxu0
    %v572 = vadd.f32 0.0, %v571
    %v573 = vpop.f32.mrf.mxu0
    %v574 = vadd.f32 0.0, %v573
    %575 = vmatmul.bf16.gmra.mxu0 %v340
    %v576 = vpop.f32.mrf.mxu0
    %v577 = vadd.f32 0.0, %v576
    %v578 = vpop.f32.mrf.mxu0
    %v579 = vadd.f32 0.0, %v578
    %580 = vmatmul.bf16.gmra.mxu0 %v342
    %v581 = vpop.f32.mrf.mxu0
    %v582 = vadd.f32 0.0, %v581
    %v583 = vpop.f32.mrf.mxu0
    %v584 = vadd.f32 0.0, %v583
    %585 = vmatmul.bf16.gmra.mxu0 %v344
    %v586 = vpop.f32.mrf.mxu0
    %v587 = vadd.f32 0.0, %v586
    %v588 = vpop.f32.mrf.mxu0
    %v589 = vadd.f32 0.0, %v588
    %590 = vmatmul.bf16.gmra.mxu0 %v346
    %v591 = vpop.f32.mrf.mxu0
    %v592 = vadd.f32 0.0, %v591
    %v593 = vpop.f32.mrf.mxu0
    %v594 = vadd.f32 0.0, %v593
    %595 = vmatmul.bf16.gmra.mxu0 %v348
    %v596 = vpop.f32.mrf.mxu0
    %v597 = vadd.f32 0.0, %v596
    %v598 = vpop.f32.mrf.mxu0
    %v599 = vadd.f32 0.0, %v598
    %600 = vmatmul.bf16.gmra.mxu0 %v350
    %v601 = vpop.f32.mrf.mxu0
    %v602 = vadd.f32 0.0, %v601
    %v603 = vpop.f32.mrf.mxu0
    %v604 = vadd.f32 0.0, %v603
    %605 = vmatmul.bf16.gmra.mxu0 %v352
    %v606 = vpop.f32.mrf.mxu0
    %v607 = vadd.f32 0.0, %v606
    %v608 = vpop.f32.mrf.mxu0
    %v609 = vadd.f32 0.0, %v608
    %610 = vmatmul.bf16.gmra.mxu0 %v354
    %v611 = vpop.f32.mrf.mxu0
    %v612 = vadd.f32 0.0, %v611
    %v613 = vpop.f32.mrf.mxu0
    %v614 = vadd.f32 0.0, %v613
    %615 = vmatmul.bf16.gmra.mxu0 %v356
    %v616 = vpop.f32.mrf.mxu0
    %v617 = vadd.f32 0.0, %v616
    %v618 = vpop.f32.mrf.mxu0
    %v619 = vadd.f32 0.0, %v618
    %620 = vmatmul.bf16.gmra.mxu0 %v358
    %v621 = vpop.f32.mrf.mxu0
    %v622 = vadd.f32 0.0, %v621
    %v623 = vpop.f32.mrf.mxu0
    %v624 = vadd.f32 0.0, %v623
    %625 = vmatmul.bf16.gmra.mxu0 %v360
    %v626 = vpop.f32.mrf.mxu0
    %v627 = vadd.f32 0.0, %v626
    %v628 = vpop.f32.mrf.mxu0
    %v629 = vadd.f32 0.0, %v628
    %630 = vmatmul.bf16.gmra.mxu0 %v362
    %v631 = vpop.f32.mrf.mxu0
    %v632 = vadd.f32 0.0, %v631
    %v633 = vpop.f32.mrf.mxu0
    %v634 = vadd.f32 0.0, %v633
    %635 = vmatmul.bf16.gmra.mxu0 %v364
    %v636 = vpop.f32.mrf.mxu0
    %v637 = vadd.f32 0.0, %v636
    %v638 = vpop.f32.mrf.mxu0
    %v639 = vadd.f32 0.0, %v638
    %640 = vmatmul.bf16.gmra.mxu0 %v366
    %v641 = vpop.f32.mrf.mxu0
    %v642 = vadd.f32 0.0, %v641
    %v643 = vpop.f32.mrf.mxu0
    %v644 = vadd.f32 0.0, %v643
    %645 = vmatmul.bf16.gmra.mxu0 %v368
    %v646 = vpop.f32.mrf.mxu0
    %v647 = vadd.f32 0.0, %v646
    %v648 = vpop.f32.mrf.mxu0
    %v649 = vadd.f32 0.0, %v648
    %650 = vmatmul.bf16.gmra.mxu0 %v370
    %v651 = vpop.f32.mrf.mxu0
    %v652 = vadd.f32 0.0, %v651
    %v653 = vpop.f32.mrf.mxu0
    %v654 = vadd.f32 0.0, %v653
    %655 = vmatmul.bf16.gmra.mxu0 %v372
    %v656 = vpop.f32.mrf.mxu0
    %v657 = vadd.f32 0.0, %v656
    %v658 = vpop.f32.mrf.mxu0
    %v659 = vadd.f32 0.0, %v658
    %660 = vmatmul.bf16.gmra.mxu0 %v374
    %v661 = vpop.f32.mrf.mxu0
    %v662 = vadd.f32 0.0, %v661
    %v663 = vpop.f32.mrf.mxu0
    %v664 = vadd.f32 0.0, %v663
    %665 = vmatmul.bf16.gmra.mxu0 %v376
    %v666 = vpop.f32.mrf.mxu0
    %v667 = vadd.f32 0.0, %v666
    %v668 = vpop.f32.mrf.mxu0
    %v669 = vadd.f32 0.0, %v668
    %670 = vmatmul.bf16.gmra.mxu0 %v378
    %v671 = vpop.f32.mrf.mxu0
    %v672 = vadd.f32 0.0, %v671
    %v673 = vpop.f32.mrf.mxu0
    %v674 = vadd.f32 0.0, %v673
    %675 = vmatmul.bf16.gmra.mxu0 %v380
    %v676 = vpop.f32.mrf.mxu0
    %v677 = vadd.f32 0.0, %v676
    %v678 = vpop.f32.mrf.mxu0
    %v679 = vadd.f32 0.0, %v678
    %680 = vmatmul.bf16.gmra.mxu0 %v382
    %v681 = vpop.f32.mrf.mxu0
    %v682 = vadd.f32 0.0, %v681
    %v683 = vpop.f32.mrf.mxu0
    %v684 = vadd.f32 0.0, %v683
    %685 = vmatmul.bf16.gmra.mxu0 %v384
    %v686 = vpop.f32.mrf.mxu0
    %v687 = vadd.f32 0.0, %v686
    %v688 = vpop.f32.mrf.mxu0
    %v689 = vadd.f32 0.0, %v688
    %690 = vmatmul.bf16.gmra.mxu0 %v386
    %v691 = vpop.f32.mrf.mxu0
    %v692 = vadd.f32 0.0, %v691
    %v693 = vpop.f32.mrf.mxu0
    %v694 = vadd.f32 0.0, %v693
    %695 = vmatmul.bf16.gmra.mxu0 %v388
    %v696 = vpop.f32.mrf.mxu0
    %v697 = vadd.f32 0.0, %v696
    %v698 = vpop.f32.mrf.mxu0
    %v699 = vadd.f32 0.0, %v698
    %700 = vmatmul.bf16.gmra.mxu0 %v390
    %v701 = vpop.f32.mrf.mxu0
    %v702 = vadd.f32 0.0, %v701
    %v703 = vpop.f32.mrf.mxu0
    %v704 = vadd.f32 0.0, %v703
    %705 = vmatmul.bf16.gmra.mxu0 %v392
    %v706 = vpop.f32.mrf.mxu0
    %v707 = vadd.f32 0.0, %v706
    %v708 = vpop.f32.mrf.mxu0
    %v709 = vadd.f32 0.0, %v708
    %710 = vmatmul.bf16.gmra.mxu0 %v394
    %v711 = vpop.f32.mrf.mxu0
    %v712 = vadd.f32 0.0, %v711
    %v713 = vpop.f32.mrf.mxu0
    %v714 = vadd.f32 0.0, %v713
    %715 = vmatmul.bf16.gmra.mxu0 %v396
    %v716 = vpop.f32.mrf.mxu0
    %v717 = vadd.f32 0.0, %v716
    %v718 = vpop.f32.mrf.mxu0
    %v719 = vadd.f32 0.0, %v718
    %720 = vmatmul.bf16.gmra.mxu0 %v398
    %v721 = vpop.f32.mrf.mxu0
    %v722 = vadd.f32 0.0, %v721
    %v723 = vpop.f32.mrf.mxu0
    %v724 = vadd.f32 0.0, %v723
    %725 = vmatmul.bf16.gmra.mxu0 %v400
    %v726 = vpop.f32.mrf.mxu0
    %v727 = vadd.f32 0.0, %v726
    %v728 = vpop.f32.mrf.mxu0
    %v729 = vadd.f32 0.0, %v728
    %730 = vdwg.mxu0
    %731 = vmatpush.bf16.msra.mxu0 %v545
    %732 = vmatpush.bf16.msra.mxu0 %v544
    %733 = vmatpush.bf16.msra.mxu0 %v543
    %734 = vmatpush.bf16.msra.mxu0 %v542
    %735 = vmatpush.bf16.msra.mxu0 %v541
    %736 = vmatpush.bf16.msra.mxu0 %v540
    %737 = vmatpush.bf16.msra.mxu0 %v539
    %738 = vmatpush.bf16.msra.mxu0 %v538
    %739 = vmatmul.bf16.gmra.mxu0 %v339
    %v740 = vpop.f32.mrf.mxu0
    %v741 = vadd.f32 %v572, %v740
    %v742 = vpop.f32.mrf.mxu0
    %v743 = vadd.f32 %v574, %v742
    %744 = vmatmul.bf16.gmra.mxu0 %v341
    %v745 = vpop.f32.mrf.mxu0
    %v746 = vadd.f32 %v577, %v745
    %v747 = vpop.f32.mrf.mxu0
    %v748 = vadd.f32 %v579, %v747
    %749 = vmatmul.bf16.gmra.mxu0 %v343
    %v750 = vpop.f32.mrf.mxu0
    %v751 = vadd.f32 %v582, %v750
    %v752 = vpop.f32.mrf.mxu0
    %v753 = vadd.f32 %v584, %v752
    %754 = vmatmul.bf16.gmra.mxu0 %v345
    %v755 = vpop.f32.mrf.mxu0
    %v756 = vadd.f32 %v587, %v755
    %v757 = vpop.f32.mrf.mxu0
    %v758 = vadd.f32 %v589, %v757
    %759 = vmatmul.bf16.gmra.mxu0 %v347
    %v760 = vpop.f32.mrf.mxu0
    %v761 = vadd.f32 %v592, %v760
    %v762 = vpop.f32.mrf.mxu0
    %v763 = vadd.f32 %v594, %v762
    %764 = vmatmul.bf16.gmra.mxu0 %v349
    %v765 = vpop.f32.mrf.mxu0
    %v766 = vadd.f32 %v597, %v765
    %v767 = vpop.f32.mrf.mxu0
    %v768 = vadd.f32 %v599, %v767
    %769 = vmatmul.bf16.gmra.mxu0 %v351
    %v770 = vpop.f32.mrf.mxu0
    %v771 = vadd.f32 %v602, %v770
    %v772 = vpop.f32.mrf.mxu0
    %v773 = vadd.f32 %v604, %v772
    %774 = vmatmul.bf16.gmra.mxu0 %v353
    %v775 = vpop.f32.mrf.mxu0
    %v776 = vadd.f32 %v607, %v775
    %v777 = vpop.f32.mrf.mxu0
    %v778 = vadd.f32 %v609, %v777
    %779 = vmatmul.bf16.gmra.mxu0 %v355
    %v780 = vpop.f32.mrf.mxu0
    %v781 = vadd.f32 %v612, %v780
    %v782 = vpop.f32.mrf.mxu0
    %v783 = vadd.f32 %v614, %v782
    %784 = vmatmul.bf16.gmra.mxu0 %v357
    %v785 = vpop.f32.mrf.mxu0
    %v786 = vadd.f32 %v617, %v785
    %v787 = vpop.f32.mrf.mxu0
    %v788 = vadd.f32 %v619, %v787
    %789 = vmatmul.bf16.gmra.mxu0 %v359
    %v790 = vpop.f32.mrf.mxu0
    %v791 = vadd.f32 %v622, %v790
    %v792 = vpop.f32.mrf.mxu0
    %v793 = vadd.f32 %v624, %v792
    %794 = vmatmul.bf16.gmra.mxu0 %v361
    %v795 = vpop.f32.mrf.mxu0
    %v796 = vadd.f32 %v627, %v795
    %v797 = vpop.f32.mrf.mxu0
    %v798 = vadd.f32 %v629, %v797
    %799 = vmatmul.bf16.gmra.mxu0 %v363
    %v800 = vpop.f32.mrf.mxu0
    %v801 = vadd.f32 %v632, %v800
    %v802 = vpop.f32.mrf.mxu0
    %v803 = vadd.f32 %v634, %v802
    %804 = vmatmul.bf16.gmra.mxu0 %v365
    %v805 = vpop.f32.mrf.mxu0
    %v806 = vadd.f32 %v637, %v805
    %v807 = vpop.f32.mrf.mxu0
    %v808 = vadd.f32 %v639, %v807
    %809 = vmatmul.bf16.gmra.mxu0 %v367
    %v810 = vpop.f32.mrf.mxu0
    %v811 = vadd.f32 %v642, %v810
    %v812 = vpop.f32.mrf.mxu0
    %v813 = vadd.f32 %v644, %v812
    %814 = vmatmul.bf16.gmra.mxu0 %v369
    %v815 = vpop.f32.mrf.mxu0
    %v816 = vadd.f32 %v647, %v815
    %v817 = vpop.f32.mrf.mxu0
    %v818 = vadd.f32 %v649, %v817
    %819 = vmatmul.bf16.gmra.mxu0 %v371
    %v820 = vpop.f32.mrf.mxu0
    %v821 = vadd.f32 %v652, %v820
    %v822 = vpop.f32.mrf.mxu0
    %v823 = vadd.f32 %v654, %v822
    %824 = vmatmul.bf16.gmra.mxu0 %v373
    %v825 = vpop.f32.mrf.mxu0
    %v826 = vadd.f32 %v657, %v825
    %v827 = vpop.f32.mrf.mxu0
    %v828 = vadd.f32 %v659, %v827
    %829 = vmatmul.bf16.gmra.mxu0 %v375
    %v830 = vpop.f32.mrf.mxu0
    %v831 = vadd.f32 %v662, %v830
    %v832 = vpop.f32.mrf.mxu0
    %v833 = vadd.f32 %v664, %v832
    %834 = vmatmul.bf16.gmra.mxu0 %v377
    %v835 = vpop.f32.mrf.mxu0
    %v836 = vadd.f32 %v667, %v835
    %v837 = vpop.f32.mrf.mxu0
    %v838 = vadd.f32 %v669, %v837
    %839 = vmatmul.bf16.gmra.mxu0 %v379
    %v840 = vpop.f32.mrf.mxu0
    %v841 = vadd.f32 %v672, %v840
    %v842 = vpop.f32.mrf.mxu0
    %v843 = vadd.f32 %v674, %v842
    %844 = vmatmul.bf16.gmra.mxu0 %v381
    %v845 = vpop.f32.mrf.mxu0
    %v846 = vadd.f32 %v677, %v845
    %v847 = vpop.f32.mrf.mxu0
    %v848 = vadd.f32 %v679, %v847
    %849 = vmatmul.bf16.gmra.mxu0 %v383
    %v850 = vpop.f32.mrf.mxu0
    %v851 = vadd.f32 %v682, %v850
    %v852 = vpop.f32.mrf.mxu0
    %v853 = vadd.f32 %v684, %v852
    %854 = vmatmul.bf16.gmra.mxu0 %v385
    %v855 = vpop.f32.mrf.mxu0
    %v856 = vadd.f32 %v687, %v855
    %v857 = vpop.f32.mrf.mxu0
    %v858 = vadd.f32 %v689, %v857
    %859 = vmatmul.bf16.gmra.mxu0 %v387
    %v860 = vpop.f32.mrf.mxu0
    %v861 = vadd.f32 %v692, %v860
    %v862 = vpop.f32.mrf.mxu0
    %v863 = vadd.f32 %v694, %v862
    %864 = vmatmul.bf16.gmra.mxu0 %v389
    %v865 = vpop.f32.mrf.mxu0
    %v866 = vadd.f32 %v697, %v865
    %v867 = vpop.f32.mrf.mxu0
    %v868 = vadd.f32 %v699, %v867
    %869 = vmatmul.bf16.gmra.mxu0 %v391
    %v870 = vpop.f32.mrf.mxu0
    %v871 = vadd.f32 %v702, %v870
    %v872 = vpop.f32.mrf.mxu0
    %v873 = vadd.f32 %v704, %v872
    %874 = vmatmul.bf16.gmra.mxu0 %v393
    %v875 = vpop.f32.mrf.mxu0
    %v876 = vadd.f32 %v707, %v875
    %v877 = vpop.f32.mrf.mxu0
    %v878 = vadd.f32 %v709, %v877
    %879 = vmatmul.bf16.gmra.mxu0 %v395
    %v880 = vpop.f32.mrf.mxu0
    %v881 = vadd.f32 %v712, %v880
    %v882 = vpop.f32.mrf.mxu0
    %v883 = vadd.f32 %v714, %v882
    %884 = vmatmul.bf16.gmra.mxu0 %v397
    %v885 = vpop.f32.mrf.mxu0
    %v886 = vadd.f32 %v717, %v885
    %v887 = vpop.f32.mrf.mxu0
    %v888 = vadd.f32 %v719, %v887
    %889 = vmatmul.bf16.gmra.mxu0 %v399
    %v890 = vpop.f32.mrf.mxu0
    %v891 = vadd.f32 %v722, %v890
    %v892 = vpop.f32.mrf.mxu0
    %v893 = vadd.f32 %v724, %v892
    %894 = vmatmul.bf16.gmra.mxu0 %v401
    %v895 = vpop.f32.mrf.mxu0
    %v896 = vadd.f32 %v727, %v895
    %v897 = vpop.f32.mrf.mxu0
    %v898 = vadd.f32 %v729, %v897
    %899 = vdwg.mxu0
    %v900 = vadd.f32 %v741, %v743
    %v901 = vadd.f32 %v900, %v746
    %v902 = vadd.f32 %v901, %v748
    %v903 = vadd.f32 %v902, %v751
    %v904 = vadd.f32 %v903, %v753
    %v905 = vadd.f32 %v904, %v756
    %v906 = vadd.f32 %v905, %v758
    %v907 = vadd.f32 %v906, %v761
    %v908 = vadd.f32 %v907, %v763
    %v909 = vadd.f32 %v908, %v766
    %v910 = vadd.f32 %v909, %v768
    %v911 = vadd.f32 %v910, %v771
    %v912 = vadd.f32 %v911, %v773
    %v913 = vadd.f32 %v912, %v776
    %v914 = vadd.f32 %v913, %v778
    %v915 = vadd.f32 %v914, %v781
    %v916 = vadd.f32 %v915, %v783
    %v917 = vadd.f32 %v916, %v786
    %v918 = vadd.f32 %v917, %v788
    %v919 = vadd.f32 %v918, %v791
    %v920 = vadd.f32 %v919, %v793
    %v921 = vadd.f32 %v920, %v796
    %v922 = vadd.f32 %v921, %v798
    %v923 = vadd.f32 %v922, %v801
    %v924 = vadd.f32 %v923, %v803
    %v925 = vadd.f32 %v924, %v806
    %v926 = vadd.f32 %v925, %v808
    %v927 = vadd.f32 %v926, %v811
    %v928 = vadd.f32 %v927, %v813
    %v929 = vadd.f32 %v928, %v816
    %v930 = vadd.f32 %v929, %v818
    %v931 = vadd.f32 %v930, %v821
    %v932 = vadd.f32 %v931, %v823
    %v933 = vadd.f32 %v932, %v826
    %v934 = vadd.f32 %v933, %v828
    %v935 = vadd.f32 %v934, %v831
    %v936 = vadd.f32 %v935, %v833
    %v937 = vadd.f32 %v936, %v836
    %v938 = vadd.f32 %v937, %v838
    %v939 = vadd.f32 %v938, %v841
    %v940 = vadd.f32 %v939, %v843
    %v941 = vadd.f32 %v940, %v846
    %v942 = vadd.f32 %v941, %v848
    %v943 = vadd.f32 %v942, %v851
    %v944 = vadd.f32 %v943, %v853
    %v945 = vadd.f32 %v944, %v856
    %v946 = vadd.f32 %v945, %v858
    %v947 = vadd.f32 %v946, %v861
    %v948 = vadd.f32 %v947, %v863
    %v949 = vadd.f32 %v948, %v866
    %v950 = vadd.f32 %v949, %v868
    %v951 = vadd.f32 %v950, %v871
    %v952 = vadd.f32 %v951, %v873
    %v953 = vadd.f32 %v952, %v876
    %v954 = vadd.f32 %v953, %v878
    %v955 = vadd.f32 %v954, %v881
    %v956 = vadd.f32 %v955, %v883
    %v957 = vadd.f32 %v956, %v886
    %v958 = vadd.f32 %v957, %v888
    %v959 = vadd.f32 %v958, %v891
    %v960 = vadd.f32 %v959, %v893
    %v961 = vadd.f32 %v960, %v896
    %v962 = vadd.f32 %v961, %v898
    %v963 = vrot.slane %v962, 4
    %v964 = vadd.f32 %v962, %v963
    %v965 = vrot.slane %v964, 2
    %v966 = vadd.f32 %v964, %v965
    %v967 = vrot.slane %v966, 1
    %v968 = vadd.f32 %v966, %v967
    %v969 = vmul.f32 %v968, 0.001953125
    %v970 = vmul.f32 %v741, %v741
    %v971 = vmul.f32 %v743, %v743
    %v972 = vmul.f32 %v746, %v746
    %v973 = vmul.f32 %v748, %v748
    %v974 = vmul.f32 %v751, %v751
    %v975 = vmul.f32 %v753, %v753
    %v976 = vmul.f32 %v756, %v756
    %v977 = vmul.f32 %v758, %v758
    %v978 = vmul.f32 %v761, %v761
    %v979 = vmul.f32 %v763, %v763
    %v980 = vmul.f32 %v766, %v766
    %v981 = vmul.f32 %v768, %v768
    %v982 = vmul.f32 %v771, %v771
    %v983 = vmul.f32 %v773, %v773
    %v984 = vmul.f32 %v776, %v776
    %v985 = vmul.f32 %v778, %v778
    %v986 = vmul.f32 %v781, %v781
    %v987 = vmul.f32 %v783, %v783
    %v988 = vmul.f32 %v786, %v786
    %v989 = vmul.f32 %v788, %v788
    %v990 = vmul.f32 %v791, %v791
    %v991 = vmul.f32 %v793, %v793
    %v992 = vmul.f32 %v796, %v796
    %v993 = vmul.f32 %v798, %v798
    %v994 = vmul.f32 %v801, %v801
    %v995 = vmul.f32 %v803, %v803
    %v996 = vmul.f32 %v806, %v806
    %v997 = vmul.f32 %v808, %v808
    %v998 = vmul.f32 %v811, %v811
    %v999 = vmul.f32 %v813, %v813
    %v1000 = vmul.f32 %v816, %v816
    %v1001 = vmul.f32 %v818, %v818
    %v1002 = vmul.f32 %v821, %v821
    %v1003 = vmul.f32 %v823, %v823
    %v1004 = vmul.f32 %v826, %v826
    %v1005 = vmul.f32 %v828, %v828
    %v1006 = vmul.f32 %v831, %v831
    %v1007 = vmul.f32 %v833, %v833
    %v1008 = vmul.f32 %v836, %v836
    %v1009 = vmul.f32 %v838, %v838
    %v1010 = vmul.f32 %v841, %v841
    %v1011 = vmul.f32 %v843, %v843
    %v1012 = vmul.f32 %v846, %v846
    %v1013 = vmul.f32 %v848, %v848
    %v1014 = vmul.f32 %v851, %v851
    %v1015 = vmul.f32 %v853, %v853
    %v1016 = vmul.f32 %v856, %v856
    %v1017 = vmul.f32 %v858, %v858
    %v1018 = vmul.f32 %v861, %v861
    %v1019 = vmul.f32 %v863, %v863
    %v1020 = vmul.f32 %v866, %v866
    %v1021 = vmul.f32 %v868, %v868
    %v1022 = vmul.f32 %v871, %v871
    %v1023 = vmul.f32 %v873, %v873
    %v1024 = vmul.f32 %v876, %v876
    %v1025 = vmul.f32 %v878, %v878
    %v1026 = vmul.f32 %v881, %v881
    %v1027 = vmul.f32 %v883, %v883
    %v1028 = vmul.f32 %v886, %v886
    %v1029 = vmul.f32 %v888, %v888
    %v1030 = vmul.f32 %v891, %v891
    %v1031 = vmul.f32 %v893, %v893
    %v1032 = vmul.f32 %v896, %v896
    %v1033 = vmul.f32 %v898, %v898
    %v1034 = vadd.f32 %v970, %v971
    %v1035 = vadd.f32 %v1034, %v972
    %v1036 = vadd.f32 %v1035, %v973
    %v1037 = vadd.f32 %v1036, %v974
    %v1038 = vadd.f32 %v1037, %v975
    %v1039 = vadd.f32 %v1038, %v976
    %v1040 = vadd.f32 %v1039, %v977
    %v1041 = vadd.f32 %v1040, %v978
    %v1042 = vadd.f32 %v1041, %v979
    %v1043 = vadd.f32 %v1042, %v980
    %v1044 = vadd.f32 %v1043, %v981
    %v1045 = vadd.f32 %v1044, %v982
    %v1046 = vadd.f32 %v1045, %v983
    %v1047 = vadd.f32 %v1046, %v984
    %v1048 = vadd.f32 %v1047, %v985
    %v1049 = vadd.f32 %v1048, %v986
    %v1050 = vadd.f32 %v1049, %v987
    %v1051 = vadd.f32 %v1050, %v988
    %v1052 = vadd.f32 %v1051, %v989
    %v1053 = vadd.f32 %v1052, %v990
    %v1054 = vadd.f32 %v1053, %v991
    %v1055 = vadd.f32 %v1054, %v992
    %v1056 = vadd.f32 %v1055, %v993
    %v1057 = vadd.f32 %v1056, %v994
    %v1058 = vadd.f32 %v1057, %v995
    %v1059 = vadd.f32 %v1058, %v996
    %v1060 = vadd.f32 %v1059, %v997
    %v1061 = vadd.f32 %v1060, %v998
    %v1062 = vadd.f32 %v1061, %v999
    %v1063 = vadd.f32 %v1062, %v1000
    %v1064 = vadd.f32 %v1063, %v1001
    %v1065 = vadd.f32 %v1064, %v1002
    %v1066 = vadd.f32 %v1065, %v1003
    %v1067 = vadd.f32 %v1066, %v1004
    %v1068 = vadd.f32 %v1067, %v1005
    %v1069 = vadd.f32 %v1068, %v1006
    %v1070 = vadd.f32 %v1069, %v1007
    %v1071 = vadd.f32 %v1070, %v1008
    %v1072 = vadd.f32 %v1071, %v1009
    %v1073 = vadd.f32 %v1072, %v1010
    %v1074 = vadd.f32 %v1073, %v1011
    %v1075 = vadd.f32 %v1074, %v1012
    %v1076 = vadd.f32 %v1075, %v1013
    %v1077 = vadd.f32 %v1076, %v1014
    %v1078 = vadd.f32 %v1077, %v1015
    %v1079 = vadd.f32 %v1078, %v1016
    %v1080 = vadd.f32 %v1079, %v1017
    %v1081 = vadd.f32 %v1080, %v1018
    %v1082 = vadd.f32 %v1081, %v1019
    %v1083 = vadd.f32 %v1082, %v1020
    %v1084 = vadd.f32 %v1083, %v1021
    %v1085 = vadd.f32 %v1084, %v1022
    %v1086 = vadd.f32 %v1085, %v1023
    %v1087 = vadd.f32 %v1086, %v1024
    %v1088 = vadd.f32 %v1087, %v1025
    %v1089 = vadd.f32 %v1088, %v1026
    %v1090 = vadd.f32 %v1089, %v1027
    %v1091 = vadd.f32 %v1090, %v1028
    %v1092 = vadd.f32 %v1091, %v1029
    %v1093 = vadd.f32 %v1092, %v1030
    %v1094 = vadd.f32 %v1093, %v1031
    %v1095 = vadd.f32 %v1094, %v1032
    %v1096 = vadd.f32 %v1095, %v1033
    %v1097 = vrot.slane %v1096, 4
    %v1098 = vadd.f32 %v1096, %v1097
    %v1099 = vrot.slane %v1098, 2
    %v1100 = vadd.f32 %v1098, %v1099
    %v1101 = vrot.slane %v1100, 1
    %v1102 = vadd.f32 %v1100, %v1101
    %v1103 = vmul.f32 %v1102, 0.001953125
    %v1104 = vmul.f32 %v969, %v969
    %v1105 = vsub.f32 %v1103, %v1104
    %v1106 = vmax.f32 %v1105, 0.0
    %v1107 = vld [vmem:[%s2] sm:$0x1]
    %v1108 = vadd.f32 %v1106, 1e-05
    %v1109 = vrsqrt.pop %v1108
    %v1110 = vmul.f32 %v1109, %v1108
    %v1111 = vmul.f32 %v1110, %v1109
    %v1112 = vmul.f32 0.5, %v1111
    %v1113 = vsub.f32 1.5, %v1112
    %v1114 = vmul.f32 %v1109, %v1113
    %vm1115 = vweird.f32 %v1108
    %vm1116 = vweird.f32 %v1109
    %vm1117 = vmor %vm1115, %vm1116
    %v1118 = vsel %vm1117, %v1109, %v1114
    %v1119 = vmul.f32 %v1107, %v1118
    %v1120 = vld [vmem:[%s3] sm:$0x1]
    %v1121 = vmul.f32 %v969, %v1119
    %v1122 = vsub.f32 %v1120, %v1121
    %v1124 = vperm.slane %v1119, 0
    %v1126 = vmul.f32 %v741, %v1124
    %v1127 = vmul.f32 %v743, %v1124
    %v1128 = vmul.f32 %v746, %v1124
    %v1129 = vmul.f32 %v748, %v1124
    %v1130 = vmul.f32 %v751, %v1124
    %v1131 = vmul.f32 %v753, %v1124
    %v1132 = vmul.f32 %v756, %v1124
    %v1133 = vmul.f32 %v758, %v1124
    %v1134 = vmul.f32 %v761, %v1124
    %v1135 = vmul.f32 %v763, %v1124
    %v1136 = vmul.f32 %v766, %v1124
    %v1137 = vmul.f32 %v768, %v1124
    %v1138 = vmul.f32 %v771, %v1124
    %v1139 = vmul.f32 %v773, %v1124
    %v1140 = vmul.f32 %v776, %v1124
    %v1141 = vmul.f32 %v778, %v1124
    %v1142 = vmul.f32 %v781, %v1124
    %v1143 = vmul.f32 %v783, %v1124
    %v1144 = vmul.f32 %v786, %v1124
    %v1145 = vmul.f32 %v788, %v1124
    %v1146 = vmul.f32 %v791, %v1124
    %v1147 = vmul.f32 %v793, %v1124
    %v1148 = vmul.f32 %v796, %v1124
    %v1149 = vmul.f32 %v798, %v1124
    %v1150 = vmul.f32 %v801, %v1124
    %v1151 = vmul.f32 %v803, %v1124
    %v1152 = vmul.f32 %v806, %v1124
    %v1153 = vmul.f32 %v808, %v1124
    %v1154 = vmul.f32 %v811, %v1124
    %v1155 = vmul.f32 %v813, %v1124
    %v1156 = vmul.f32 %v816, %v1124
    %v1157 = vmul.f32 %v818, %v1124
    %v1158 = vmul.f32 %v821, %v1124
    %v1159 = vmul.f32 %v823, %v1124
    %v1160 = vmul.f32 %v826, %v1124
    %v1161 = vmul.f32 %v828, %v1124
    %v1162 = vmul.f32 %v831, %v1124
    %v1163 = vmul.f32 %v833, %v1124
    %v1164 = vmul.f32 %v836, %v1124
    %v1165 = vmul.f32 %v838, %v1124
    %v1166 = vmul.f32 %v841, %v1124
    %v1167 = vmul.f32 %v843, %v1124
    %v1168 = vmul.f32 %v846, %v1124
    %v1169 = vmul.f32 %v848, %v1124
    %v1170 = vmul.f32 %v851, %v1124
    %v1171 = vmul.f32 %v853, %v1124
    %v1172 = vmul.f32 %v856, %v1124
    %v1173 = vmul.f32 %v858, %v1124
    %v1174 = vmul.f32 %v861, %v1124
    %v1175 = vmul.f32 %v863, %v1124
    %v1176 = vmul.f32 %v866, %v1124
    %v1177 = vmul.f32 %v868, %v1124
    %v1178 = vmul.f32 %v871, %v1124
    %v1179 = vmul.f32 %v873, %v1124
    %v1180 = vmul.f32 %v876, %v1124
    %v1181 = vmul.f32 %v878, %v1124
    %v1182 = vmul.f32 %v881, %v1124
    %v1183 = vmul.f32 %v883, %v1124
    %v1184 = vmul.f32 %v886, %v1124
    %v1185 = vmul.f32 %v888, %v1124
    %v1186 = vmul.f32 %v891, %v1124
    %v1187 = vmul.f32 %v893, %v1124
    %v1188 = vmul.f32 %v896, %v1124
    %v1189 = vmul.f32 %v898, %v1124
    %v1191 = vperm.slane %v1122, 0
    %v1193 = vadd.f32 %v1126, %v1191
    %v1194 = vadd.f32 %v1127, %v1191
    %v1195 = vadd.f32 %v1128, %v1191
    %v1196 = vadd.f32 %v1129, %v1191
    %v1197 = vadd.f32 %v1130, %v1191
    %v1198 = vadd.f32 %v1131, %v1191
    %v1199 = vadd.f32 %v1132, %v1191
    %v1200 = vadd.f32 %v1133, %v1191
    %v1201 = vadd.f32 %v1134, %v1191
    %v1202 = vadd.f32 %v1135, %v1191
    %v1203 = vadd.f32 %v1136, %v1191
    %v1204 = vadd.f32 %v1137, %v1191
    %v1205 = vadd.f32 %v1138, %v1191
    %v1206 = vadd.f32 %v1139, %v1191
    %v1207 = vadd.f32 %v1140, %v1191
    %v1208 = vadd.f32 %v1141, %v1191
    %v1209 = vadd.f32 %v1142, %v1191
    %v1210 = vadd.f32 %v1143, %v1191
    %v1211 = vadd.f32 %v1144, %v1191
    %v1212 = vadd.f32 %v1145, %v1191
    %v1213 = vadd.f32 %v1146, %v1191
    %v1214 = vadd.f32 %v1147, %v1191
    %v1215 = vadd.f32 %v1148, %v1191
    %v1216 = vadd.f32 %v1149, %v1191
    %v1217 = vadd.f32 %v1150, %v1191
    %v1218 = vadd.f32 %v1151, %v1191
    %v1219 = vadd.f32 %v1152, %v1191
    %v1220 = vadd.f32 %v1153, %v1191
    %v1221 = vadd.f32 %v1154, %v1191
    %v1222 = vadd.f32 %v1155, %v1191
    %v1223 = vadd.f32 %v1156, %v1191
    %v1224 = vadd.f32 %v1157, %v1191
    %v1225 = vadd.f32 %v1158, %v1191
    %v1226 = vadd.f32 %v1159, %v1191
    %v1227 = vadd.f32 %v1160, %v1191
    %v1228 = vadd.f32 %v1161, %v1191
    %v1229 = vadd.f32 %v1162, %v1191
    %v1230 = vadd.f32 %v1163, %v1191
    %v1231 = vadd.f32 %v1164, %v1191
    %v1232 = vadd.f32 %v1165, %v1191
    %v1233 = vadd.f32 %v1166, %v1191
    %v1234 = vadd.f32 %v1167, %v1191
    %v1235 = vadd.f32 %v1168, %v1191
    %v1236 = vadd.f32 %v1169, %v1191
    %v1237 = vadd.f32 %v1170, %v1191
    %v1238 = vadd.f32 %v1171, %v1191
    %v1239 = vadd.f32 %v1172, %v1191
    %v1240 = vadd.f32 %v1173, %v1191
    %v1241 = vadd.f32 %v1174, %v1191
    %v1242 = vadd.f32 %v1175, %v1191
    %v1243 = vadd.f32 %v1176, %v1191
    %v1244 = vadd.f32 %v1177, %v1191
    %v1245 = vadd.f32 %v1178, %v1191
    %v1246 = vadd.f32 %v1179, %v1191
    %v1247 = vadd.f32 %v1180, %v1191
    %v1248 = vadd.f32 %v1181, %v1191
    %v1249 = vadd.f32 %v1182, %v1191
    %v1250 = vadd.f32 %v1183, %v1191
    %v1251 = vadd.f32 %v1184, %v1191
    %v1252 = vadd.f32 %v1185, %v1191
    %v1253 = vadd.f32 %v1186, %v1191
    %v1254 = vadd.f32 %v1187, %v1191
    %v1255 = vadd.f32 %v1188, %v1191
    %v1256 = vadd.f32 %v1189, %v1191
    %v1257 = vmax.f32 %v1193, 0.0
    %v1258 = vmax.f32 %v1194, 0.0
    %v1259 = vmax.f32 %v1195, 0.0
    %v1260 = vmax.f32 %v1196, 0.0
    %v1261 = vmax.f32 %v1197, 0.0
    %v1262 = vmax.f32 %v1198, 0.0
    %v1263 = vmax.f32 %v1199, 0.0
    %v1264 = vmax.f32 %v1200, 0.0
    %v1265 = vmax.f32 %v1201, 0.0
    %v1266 = vmax.f32 %v1202, 0.0
    %v1267 = vmax.f32 %v1203, 0.0
    %v1268 = vmax.f32 %v1204, 0.0
    %v1269 = vmax.f32 %v1205, 0.0
    %v1270 = vmax.f32 %v1206, 0.0
    %v1271 = vmax.f32 %v1207, 0.0
    %v1272 = vmax.f32 %v1208, 0.0
    %v1273 = vmax.f32 %v1209, 0.0
    %v1274 = vmax.f32 %v1210, 0.0
    %v1275 = vmax.f32 %v1211, 0.0
    %v1276 = vmax.f32 %v1212, 0.0
    %v1277 = vmax.f32 %v1213, 0.0
    %v1278 = vmax.f32 %v1214, 0.0
    %v1279 = vmax.f32 %v1215, 0.0
    %v1280 = vmax.f32 %v1216, 0.0
    %v1281 = vmax.f32 %v1217, 0.0
    %v1282 = vmax.f32 %v1218, 0.0
    %v1283 = vmax.f32 %v1219, 0.0
    %v1284 = vmax.f32 %v1220, 0.0
    %v1285 = vmax.f32 %v1221, 0.0
    %v1286 = vmax.f32 %v1222, 0.0
    %v1287 = vmax.f32 %v1223, 0.0
    %v1288 = vmax.f32 %v1224, 0.0
    %v1289 = vmax.f32 %v1225, 0.0
    %v1290 = vmax.f32 %v1226, 0.0
    %v1291 = vmax.f32 %v1227, 0.0
    %v1292 = vmax.f32 %v1228, 0.0
    %v1293 = vmax.f32 %v1229, 0.0
    %v1294 = vmax.f32 %v1230, 0.0
    %v1295 = vmax.f32 %v1231, 0.0
    %v1296 = vmax.f32 %v1232, 0.0
    %v1297 = vmax.f32 %v1233, 0.0
    %v1298 = vmax.f32 %v1234, 0.0
    %v1299 = vmax.f32 %v1235, 0.0
    %v1300 = vmax.f32 %v1236, 0.0
    %v1301 = vmax.f32 %v1237, 0.0
    %v1302 = vmax.f32 %v1238, 0.0
    %v1303 = vmax.f32 %v1239, 0.0
    %v1304 = vmax.f32 %v1240, 0.0
    %v1305 = vmax.f32 %v1241, 0.0
    %v1306 = vmax.f32 %v1242, 0.0
    %v1307 = vmax.f32 %v1243, 0.0
    %v1308 = vmax.f32 %v1244, 0.0
    %v1309 = vmax.f32 %v1245, 0.0
    %v1310 = vmax.f32 %v1246, 0.0
    %v1311 = vmax.f32 %v1247, 0.0
    %v1312 = vmax.f32 %v1248, 0.0
    %v1313 = vmax.f32 %v1249, 0.0
    %v1314 = vmax.f32 %v1250, 0.0
    %v1315 = vmax.f32 %v1251, 0.0
    %v1316 = vmax.f32 %v1252, 0.0
    %v1317 = vmax.f32 %v1253, 0.0
    %v1318 = vmax.f32 %v1254, 0.0
    %v1319 = vmax.f32 %v1255, 0.0
    %v1320 = vmax.f32 %v1256, 0.0
    %v1321 = vpack.c.bf16 %v1257, %v1257
    %v1322 = vpack.c.bf16 %v1258, %v1258
    %v1323 = vpack.c.bf16 %v1259, %v1259
    %v1324 = vpack.c.bf16 %v1260, %v1260
    %v1325 = vpack.c.bf16 %v1261, %v1261
    %v1326 = vpack.c.bf16 %v1262, %v1262
    %v1327 = vpack.c.bf16 %v1263, %v1263
    %v1328 = vpack.c.bf16 %v1264, %v1264
    %v1329 = vpack.c.bf16 %v1265, %v1265
    %v1330 = vpack.c.bf16 %v1266, %v1266
    %v1331 = vpack.c.bf16 %v1267, %v1267
    %v1332 = vpack.c.bf16 %v1268, %v1268
    %v1333 = vpack.c.bf16 %v1269, %v1269
    %v1334 = vpack.c.bf16 %v1270, %v1270
    %v1335 = vpack.c.bf16 %v1271, %v1271
    %v1336 = vpack.c.bf16 %v1272, %v1272
    %v1337 = vpack.c.bf16 %v1273, %v1273
    %v1338 = vpack.c.bf16 %v1274, %v1274
    %v1339 = vpack.c.bf16 %v1275, %v1275
    %v1340 = vpack.c.bf16 %v1276, %v1276
    %v1341 = vpack.c.bf16 %v1277, %v1277
    %v1342 = vpack.c.bf16 %v1278, %v1278
    %v1343 = vpack.c.bf16 %v1279, %v1279
    %v1344 = vpack.c.bf16 %v1280, %v1280
    %v1345 = vpack.c.bf16 %v1281, %v1281
    %v1346 = vpack.c.bf16 %v1282, %v1282
    %v1347 = vpack.c.bf16 %v1283, %v1283
    %v1348 = vpack.c.bf16 %v1284, %v1284
    %v1349 = vpack.c.bf16 %v1285, %v1285
    %v1350 = vpack.c.bf16 %v1286, %v1286
    %v1351 = vpack.c.bf16 %v1287, %v1287
    %v1352 = vpack.c.bf16 %v1288, %v1288
    %v1353 = vpack.c.bf16 %v1289, %v1289
    %v1354 = vpack.c.bf16 %v1290, %v1290
    %v1355 = vpack.c.bf16 %v1291, %v1291
    %v1356 = vpack.c.bf16 %v1292, %v1292
    %v1357 = vpack.c.bf16 %v1293, %v1293
    %v1358 = vpack.c.bf16 %v1294, %v1294
    %v1359 = vpack.c.bf16 %v1295, %v1295
    %v1360 = vpack.c.bf16 %v1296, %v1296
    %v1361 = vpack.c.bf16 %v1297, %v1297
    %v1362 = vpack.c.bf16 %v1298, %v1298
    %v1363 = vpack.c.bf16 %v1299, %v1299
    %v1364 = vpack.c.bf16 %v1300, %v1300
    %v1365 = vpack.c.bf16 %v1301, %v1301
    %v1366 = vpack.c.bf16 %v1302, %v1302
    %v1367 = vpack.c.bf16 %v1303, %v1303
    %v1368 = vpack.c.bf16 %v1304, %v1304
    %v1369 = vpack.c.bf16 %v1305, %v1305
    %v1370 = vpack.c.bf16 %v1306, %v1306
    %v1371 = vpack.c.bf16 %v1307, %v1307
    %v1372 = vpack.c.bf16 %v1308, %v1308
    %v1373 = vpack.c.bf16 %v1309, %v1309
    %v1374 = vpack.c.bf16 %v1310, %v1310
    %v1375 = vpack.c.bf16 %v1311, %v1311
    %v1376 = vpack.c.bf16 %v1312, %v1312
    %v1377 = vpack.c.bf16 %v1313, %v1313
    %v1378 = vpack.c.bf16 %v1314, %v1314
    %v1379 = vpack.c.bf16 %v1315, %v1315
    %v1380 = vpack.c.bf16 %v1316, %v1316
    %v1381 = vpack.c.bf16 %v1317, %v1317
    %v1382 = vpack.c.bf16 %v1318, %v1318
    %v1383 = vpack.c.bf16 %v1319, %v1319
    %v1384 = vpack.c.bf16 %v1320, %v1320
    %1385 = vst [vmem:[#allocation7] sm:$0xf] %v1321
    %1386 = vst [vmem:[#allocation7 + $0x4] sm:$0xf] %v1322
    %1387 = vst [vmem:[#allocation7 + $0x8] sm:$0xf] %v1323
    %1388 = vst [vmem:[#allocation7 + $0xc] sm:$0xf] %v1324
    %1389 = vst [vmem:[#allocation7 + $0x10] sm:$0xf] %v1325
    %1390 = vst [vmem:[#allocation7 + $0x14] sm:$0xf] %v1326
    %1391 = vst [vmem:[#allocation7 + $0x18] sm:$0xf] %v1327
    %1392 = vst [vmem:[#allocation7 + $0x1c] sm:$0xf] %v1328
    %1393 = vst [vmem:[#allocation7 + $0x20] sm:$0xf] %v1329
    %1394 = vst [vmem:[#allocation7 + $0x24] sm:$0xf] %v1330
    %1395 = vst [vmem:[#allocation7 + $0x28] sm:$0xf] %v1331
    %1396 = vst [vmem:[#allocation7 + $0x2c] sm:$0xf] %v1332
    %1397 = vst [vmem:[#allocation7 + $0x30] sm:$0xf] %v1333
    %1398 = vst [vmem:[#allocation7 + $0x34] sm:$0xf] %v1334
    %1399 = vst [vmem:[#allocation7 + $0x38] sm:$0xf] %v1335
    %1400 = vst [vmem:[#allocation7 + $0x3c] sm:$0xf] %v1336
    %1401 = vst [vmem:[#allocation7 + $0x40] sm:$0xf] %v1337
    %1402 = vst [vmem:[#allocation7 + $0x44] sm:$0xf] %v1338
    %1403 = vst [vmem:[#allocation7 + $0x48] sm:$0xf] %v1339
    %1404 = vst [vmem:[#allocation7 + $0x4c] sm:$0xf] %v1340
    %1405 = vst [vmem:[#allocation7 + $0x50] sm:$0xf] %v1341
    %1406 = vst [vmem:[#allocation7 + $0x54] sm:$0xf] %v1342
    %1407 = vst [vmem:[#allocation7 + $0x58] sm:$0xf] %v1343
    %1408 = vst [vmem:[#allocation7 + $0x5c] sm:$0xf] %v1344
    %1409 = vst [vmem:[#allocation7 + $0x60] sm:$0xf] %v1345
    %1410 = vst [vmem:[#allocation7 + $0x64] sm:$0xf] %v1346
    %1411 = vst [vmem:[#allocation7 + $0x68] sm:$0xf] %v1347
    %1412 = vst [vmem:[#allocation7 + $0x6c] sm:$0xf] %v1348
    %1413 = vst [vmem:[#allocation7 + $0x70] sm:$0xf] %v1349
    %1414 = vst [vmem:[#allocation7 + $0x74] sm:$0xf] %v1350
    %1415 = vst [vmem:[#allocation7 + $0x78] sm:$0xf] %v1351
    %1416 = vst [vmem:[#allocation7 + $0x7c] sm:$0xf] %v1352
    %1417 = vst [vmem:[#allocation7 + $0x80] sm:$0xf] %v1353
    %1418 = vst [vmem:[#allocation7 + $0x84] sm:$0xf] %v1354
    %1419 = vst [vmem:[#allocation7 + $0x88] sm:$0xf] %v1355
    %1420 = vst [vmem:[#allocation7 + $0x8c] sm:$0xf] %v1356
    %1421 = vst [vmem:[#allocation7 + $0x90] sm:$0xf] %v1357
    %1422 = vst [vmem:[#allocation7 + $0x94] sm:$0xf] %v1358
    %1423 = vst [vmem:[#allocation7 + $0x98] sm:$0xf] %v1359
    %1424 = vst [vmem:[#allocation7 + $0x9c] sm:$0xf] %v1360
    %1425 = vst [vmem:[#allocation7 + $0xa0] sm:$0xf] %v1361
    %1426 = vst [vmem:[#allocation7 + $0xa4] sm:$0xf] %v1362
    %1427 = vst [vmem:[#allocation7 + $0xa8] sm:$0xf] %v1363
    %1428 = vst [vmem:[#allocation7 + $0xac] sm:$0xf] %v1364
    %1429 = vst [vmem:[#allocation7 + $0xb0] sm:$0xf] %v1365
    %1430 = vst [vmem:[#allocation7 + $0xb4] sm:$0xf] %v1366
    %1431 = vst [vmem:[#allocation7 + $0xb8] sm:$0xf] %v1367
    %1432 = vst [vmem:[#allocation7 + $0xbc] sm:$0xf] %v1368
    %1433 = vst [vmem:[#allocation7 + $0xc0] sm:$0xf] %v1369
    %1434 = vst [vmem:[#allocation7 + $0xc4] sm:$0xf] %v1370
    %1435 = vst [vmem:[#allocation7 + $0xc8] sm:$0xf] %v1371
    %1436 = vst [vmem:[#allocation7 + $0xcc] sm:$0xf] %v1372
    %1437 = vst [vmem:[#allocation7 + $0xd0] sm:$0xf] %v1373
    %1438 = vst [vmem:[#allocation7 + $0xd4] sm:$0xf] %v1374
    %1439 = vst [vmem:[#allocation7 + $0xd8] sm:$0xf] %v1375
    %1440 = vst [vmem:[#allocation7 + $0xdc] sm:$0xf] %v1376
    %1441 = vst [vmem:[#allocation7 + $0xe0] sm:$0xf] %v1377
    %1442 = vst [vmem:[#allocation7 + $0xe4] sm:$0xf] %v1378
    %1443 = vst [vmem:[#allocation7 + $0xe8] sm:$0xf] %v1379
    %1444 = vst [vmem:[#allocation7 + $0xec] sm:$0xf] %v1380
    %1445 = vst [vmem:[#allocation7 + $0xf0] sm:$0xf] %v1381
    %1446 = vst [vmem:[#allocation7 + $0xf4] sm:$0xf] %v1382
    %1447 = vst [vmem:[#allocation7 + $0xf8] sm:$0xf] %v1383
    %1448 = vst [vmem:[#allocation7 + $0xfc] sm:$0xf] %v1384
    // Predicated region
    $region26: #{tpu_custom_call.1} parent=1 // pred_check
      _
    $region27: #{tpu_custom_call.1} parent=1 // pred_check_branch
      %1450 = sbr.rel (0) target = $region29
    $region28: #{tpu_custom_call.1} parent=1 // pred_region
      %1452 = vsyncadd [#allocation4], 0
      %s1453 = sshll.u32 [#allocation7], 4
      %s1454 = int_to_ptr.vmem [resolvable:$true] %s1453
      %s1455 = sshll.u32 %s4, 4
      %s1456 = int_to_ptr.hbm [resolvable:$true] %s1455
      %1461 = dma.vmem_to_hbm [thread:$0]  %s1454, 4096, %s1456, [#allocation4], 64, 64, 4
    $region29: #{tpu_custom_call.1} parent=1 // pred_fallthru
      _
    // Predicated region
    $region30: #{tpu_custom_call.1} parent=1 // pred_check
      _
    $region31: #{tpu_custom_call.1} parent=1 // pred_check_branch
      %1463 = sbr.rel (0) target = $region33
    $region32: #{tpu_custom_call.1} parent=1 // pred_region
      %1465 = dma.done [#allocation4], 4096
    $region33: #{tpu_custom_call.1} parent=1 // pred_fallthru
      _
    %1466 = vsyncpa [#allocation3], 1
    %1467 = vsyncpa [#allocation6], 1
    %1468 = vsyncpa [#allocation4], 1

</llo_original>
